<compile_context>
chip_gen: v7x
topology: tpu7x:2x2x1
jax: 0.10.0
libtpu: 0.0.40
codegen_flags: <defaults>
</compile_context>

<pallas_src>
import jax
import jax.numpy as jnp
from jax.experimental import pallas as pl
from jax.experimental.pallas import tpu as pltpu


def _mm3_per_lane(a, b):
    """Per-lane (3,3) @ (3,3).

    a, b: (9, L) f32 where row 3*i+j holds element (i, j) of each lane's 3x3
    matrix. Every term is a (1, L) x (1, L) elementwise multiply -> pure VPU,
    zero MXU / cross-lane traffic.
    """
    rows = []
    for i in range(3):
        for j in range(3):
            acc = a[3 * i + 0:3 * i + 1, :] * b[0 + j:1 + j, :]
            acc = acc + a[3 * i + 1:3 * i + 2, :] * b[3 + j:4 + j, :]
            acc = acc + a[3 * i + 2:3 * i + 3, :] * b[6 + j:7 + j, :]
            rows.append(acc)
    return jnp.concatenate(rows, axis=0)  # (9, L)


def _batched_kernel(p_ref, o_ref):
    # p_ref: (18, L) f32. Rows 0..8 = x flattened row-major, rows 9..17 = inp.
    p = p_ref[...]
    x = p[0:9, :]
    w = p[9:18, :]

    r = jnp.maximum(x, 0.0)                                   # v1 = relu_(x)
    v2 = jnp.sum(r, axis=0, keepdims=True) * (1.0 / 9.0)      # v2 = r.mean()
    v3 = _mm3_per_lane(r, r)                                  # v3 = mm(x, x)
    v4 = _mm3_per_lane(v3, v3) + v2                           # v4 = v3@v3 + v2
    o_ref[...] = v4 + w                                       # v5 = v4 + inp


def model_forward_batched(x, inp, *, lane_block=None):
    """x, inp: (B, 3, 3) f32 -> (B, 3, 3) f32 (B independent problems)."""
    B = x.shape[0]
    assert x.shape == (B, 3, 3) and inp.shape == (B, 3, 3)

    if lane_block is None:
        # One problem per lane; keep per-step block lane-dense (>=128) but tiny.
        lane_block = min(1024, ((B + 127) // 128) * 128)
    Bp = ((B + lane_block - 1) // lane_block) * lane_block

    # Pack both inputs into a single lane-dense (18, Bp) slab: 1 DMA in, 1 out.
    packed = jnp.concatenate(
        [x.reshape(B, 9), inp.reshape(B, 9)], axis=1).astype(jnp.float32)
    if Bp != B:
        packed = jnp.pad(packed, ((0, Bp - B), (0, 0)))
    packed = packed.T  # (18, Bp)

    out = pl.pallas_call(
        _batched_kernel,
        out_shape=jax.ShapeDtypeStruct((9, Bp), jnp.float32),
        grid=(Bp // lane_block,),
        in_specs=[pl.BlockSpec((18, lane_block), lambda i: (0, i))],
        out_specs=pl.BlockSpec((9, lane_block), lambda i: (0, i)),
        compiler_params=pltpu.CompilerParams(
            dimension_semantics=("parallel",)),
    )(packed)

    return out[:, :B].T.reshape(B, 3, 3)


def model_forward(x, inp):
    """Single (3, 3) pair — same signature/semantics as the PyTorch module.

    NOTE: for a true one-off (3, 3) call, plain XLA fusion would beat any
    custom call; this path reuses the batched kernel at B=1 for API parity.
    """
    return model_forward_batched(x[None], inp[None])[0]


def _reference(x, inp):
    r = jnp.maximum(x, 0.0)
    v2 = jnp.mean(r)
    v3 = r @ r
    v4 = v3 @ v3 + v2
    return v4 + inp


if __name__ == "__main__":
    key = jax.random.PRNGKey(0)
    k1, k2, k3, k4 = jax.random.split(key, 4)

    # Batched: 256 independent (3, 3) problems, two 128-lane grid steps.
    B = 256
    xb = jax.random.normal(k1, (B, 3, 3), dtype=jnp.float32)
    ib = jax.random.normal(k2, (B, 3, 3), dtype=jnp.float32)
    out_b = model_forward_batched(xb, ib, lane_block=128)
    jax.block_until_ready(out_b)
    ref_b = jax.vmap(_reference)(xb, ib)
    assert out_b.shape == (B, 3, 3)
    assert jnp.allclose(out_b, ref_b, atol=1e-4, rtol=1e-4)

    # Ragged batch (exercises lane padding).
    B2 = 5
    xr = jax.random.normal(k3, (B2, 3, 3), dtype=jnp.float32)
    ir = jax.random.normal(k4, (B2, 3, 3), dtype=jnp.float32)
    out_r = model_forward_batched(xr, ir)
    jax.block_until_ready(out_r)
    ref_r = jax.vmap(_reference)(xr, ir)
    assert jnp.allclose(out_r, ref_r, atol=1e-4, rtol=1e-4)

    # Single (3, 3) pair — original module signature.
    x1, i1 = xb[0], ib[0]
    out_1 = model_forward(x1, i1)
    jax.block_until_ready(out_1)
    assert out_1.shape == (3, 3)
    assert jnp.allclose(out_1, _reference(x1, i1), atol=1e-4, rtol=1e-4)

    print("KERNEL_OK")
</pallas_src>

<mosaic_0001>
module attributes {stable_mosaic.version = 11 : i64} {
  func.func @_batched_kernel(%arg0: i32, %arg1: memref<18x128xf32, #tpu.memory_space<vmem>>, %arg2: memref<9x128xf32, #tpu.memory_space<vmem>>) attributes {dimension_semantics = [#tpu.dimension_semantics<parallel>], iteration_bounds = array<i64: 2>, scalar_prefetch = 0 : i64, scratch_operands = 0 : i64, tpu.core_type = #tpu.core_type<tc>, window_params = [{transform_indices = @transform_0, window_bounds = array<i64: 18, 128>}, {transform_indices = @transform_1, window_bounds = array<i64: 9, 128>}]} {
    %c0 = arith.constant 0 : index
    %c0_0 = arith.constant 0 : index
    %0 = vector.load %arg1[%c0, %c0_0] : memref<18x128xf32, #tpu.memory_space<vmem>>, vector<18x128xf32>
    %1 = vector.extract_strided_slice %0 {offsets = [0, 0], sizes = [9, 128], strides = [1, 1]} : vector<18x128xf32> to vector<9x128xf32>
    %2 = vector.extract_strided_slice %0 {offsets = [9, 0], sizes = [9, 128], strides = [1, 1]} : vector<18x128xf32> to vector<9x128xf32>
    %cst = arith.constant 0.000000e+00 : f32
    %3 = vector.broadcast %cst : f32 to vector<9x128xf32>
    %4 = arith.maximumf %1, %3 : vector<9x128xf32>
    %cst_1 = arith.constant dense<0.000000e+00> : vector<128xf32>
    %5 = vector.multi_reduction <add>, %4, %cst_1 [0] : vector<9x128xf32> to vector<128xf32>
    %6 = vector.shape_cast %5 : vector<128xf32> to vector<1x128xf32>
    %cst_2 = arith.constant 0.111111112 : f32
    %7 = vector.broadcast %cst_2 : f32 to vector<1x128xf32>
    %8 = arith.mulf %6, %7 : vector<1x128xf32>
    %9 = vector.extract_strided_slice %4 {offsets = [0, 0], sizes = [1, 128], strides = [1, 1]} : vector<9x128xf32> to vector<1x128xf32>
    %10 = vector.extract_strided_slice %4 {offsets = [0, 0], sizes = [1, 128], strides = [1, 1]} : vector<9x128xf32> to vector<1x128xf32>
    %11 = arith.mulf %9, %10 : vector<1x128xf32>
    %12 = vector.extract_strided_slice %4 {offsets = [1, 0], sizes = [1, 128], strides = [1, 1]} : vector<9x128xf32> to vector<1x128xf32>
    %13 = vector.extract_strided_slice %4 {offsets = [3, 0], sizes = [1, 128], strides = [1, 1]} : vector<9x128xf32> to vector<1x128xf32>
    %14 = arith.mulf %12, %13 : vector<1x128xf32>
    %15 = arith.addf %11, %14 : vector<1x128xf32>
    %16 = vector.extract_strided_slice %4 {offsets = [2, 0], sizes = [1, 128], strides = [1, 1]} : vector<9x128xf32> to vector<1x128xf32>
    %17 = vector.extract_strided_slice %4 {offsets = [6, 0], sizes = [1, 128], strides = [1, 1]} : vector<9x128xf32> to vector<1x128xf32>
    %18 = arith.mulf %16, %17 : vector<1x128xf32>
    %19 = arith.addf %15, %18 : vector<1x128xf32>
    %20 = vector.extract_strided_slice %4 {offsets = [0, 0], sizes = [1, 128], strides = [1, 1]} : vector<9x128xf32> to vector<1x128xf32>
    %21 = vector.extract_strided_slice %4 {offsets = [1, 0], sizes = [1, 128], strides = [1, 1]} : vector<9x128xf32> to vector<1x128xf32>
    %22 = arith.mulf %20, %21 : vector<1x128xf32>
    %23 = vector.extract_strided_slice %4 {offsets = [1, 0], sizes = [1, 128], strides = [1, 1]} : vector<9x128xf32> to vector<1x128xf32>
    %24 = vector.extract_strided_slice %4 {offsets = [4, 0], sizes = [1, 128], strides = [1, 1]} : vector<9x128xf32> to vector<1x128xf32>
    %25 = arith.mulf %23, %24 : vector<1x128xf32>
    %26 = arith.addf %22, %25 : vector<1x128xf32>
    %27 = vector.extract_strided_slice %4 {offsets = [2, 0], sizes = [1, 128], strides = [1, 1]} : vector<9x128xf32> to vector<1x128xf32>
    %28 = vector.extract_strided_slice %4 {offsets = [7, 0], sizes = [1, 128], strides = [1, 1]} : vector<9x128xf32> to vector<1x128xf32>
    %29 = arith.mulf %27, %28 : vector<1x128xf32>
    %30 = arith.addf %26, %29 : vector<1x128xf32>
    %31 = vector.extract_strided_slice %4 {offsets = [0, 0], sizes = [1, 128], strides = [1, 1]} : vector<9x128xf32> to vector<1x128xf32>
    %32 = vector.extract_strided_slice %4 {offsets = [2, 0], sizes = [1, 128], strides = [1, 1]} : vector<9x128xf32> to vector<1x128xf32>
    %33 = arith.mulf %31, %32 : vector<1x128xf32>
    %34 = vector.extract_strided_slice %4 {offsets = [1, 0], sizes = [1, 128], strides = [1, 1]} : vector<9x128xf32> to vector<1x128xf32>
    %35 = vector.extract_strided_slice %4 {offsets = [5, 0], sizes = [1, 128], strides = [1, 1]} : vector<9x128xf32> to vector<1x128xf32>
    %36 = arith.mulf %34, %35 : vector<1x128xf32>
    %37 = arith.addf %33, %36 : vector<1x128xf32>
    %38 = vector.extract_strided_slice %4 {offsets = [2, 0], sizes = [1, 128], strides = [1, 1]} : vector<9x128xf32> to vector<1x128xf32>
    %39 = vector.extract_strided_slice %4 {offsets = [8, 0], sizes = [1, 128], strides = [1, 1]} : vector<9x128xf32> to vector<1x128xf32>
    %40 = arith.mulf %38, %39 : vector<1x128xf32>
    %41 = arith.addf %37, %40 : vector<1x128xf32>
    %42 = vector.extract_strided_slice %4 {offsets = [3, 0], sizes = [1, 128], strides = [1, 1]} : vector<9x128xf32> to vector<1x128xf32>
    %43 = vector.extract_strided_slice %4 {offsets = [0, 0], sizes = [1, 128], strides = [1, 1]} : vector<9x128xf32> to vector<1x128xf32>
    %44 = arith.mulf %42, %43 : vector<1x128xf32>
    %45 = vector.extract_strided_slice %4 {offsets = [4, 0], sizes = [1, 128], strides = [1, 1]} : vector<9x128xf32> to vector<1x128xf32>
    %46 = vector.extract_strided_slice %4 {offsets = [3, 0], sizes = [1, 128], strides = [1, 1]} : vector<9x128xf32> to vector<1x128xf32>
    %47 = arith.mulf %45, %46 : vector<1x128xf32>
    %48 = arith.addf %44, %47 : vector<1x128xf32>
    %49 = vector.extract_strided_slice %4 {offsets = [5, 0], sizes = [1, 128], strides = [1, 1]} : vector<9x128xf32> to vector<1x128xf32>
    %50 = vector.extract_strided_slice %4 {offsets = [6, 0], sizes = [1, 128], strides = [1, 1]} : vector<9x128xf32> to vector<1x128xf32>
    %51 = arith.mulf %49, %50 : vector<1x128xf32>
    %52 = arith.addf %48, %51 : vector<1x128xf32>
    %53 = vector.extract_strided_slice %4 {offsets = [3, 0], sizes = [1, 128], strides = [1, 1]} : vector<9x128xf32> to vector<1x128xf32>
    %54 = vector.extract_strided_slice %4 {offsets = [1, 0], sizes = [1, 128], strides = [1, 1]} : vector<9x128xf32> to vector<1x128xf32>
    %55 = arith.mulf %53, %54 : vector<1x128xf32>
    %56 = vector.extract_strided_slice %4 {offsets = [4, 0], sizes = [1, 128], strides = [1, 1]} : vector<9x128xf32> to vector<1x128xf32>
    %57 = vector.extract_strided_slice %4 {offsets = [4, 0], sizes = [1, 128], strides = [1, 1]} : vector<9x128xf32> to vector<1x128xf32>
    %58 = arith.mulf %56, %57 : vector<1x128xf32>
    %59 = arith.addf %55, %58 : vector<1x128xf32>
    %60 = vector.extract_strided_slice %4 {offsets = [5, 0], sizes = [1, 128], strides = [1, 1]} : vector<9x128xf32> to vector<1x128xf32>
    %61 = vector.extract_strided_slice %4 {offsets = [7, 0], sizes = [1, 128], strides = [1, 1]} : vector<9x128xf32> to vector<1x128xf32>
    %62 = arith.mulf %60, %61 : vector<1x128xf32>
    %63 = arith.addf %59, %62 : vector<1x128xf32>
    %64 = vector.extract_strided_slice %4 {offsets = [3, 0], sizes = [1, 128], strides = [1, 1]} : vector<9x128xf32> to vector<1x128xf32>
    %65 = vector.extract_strided_slice %4 {offsets = [2, 0], sizes = [1, 128], strides = [1, 1]} : vector<9x128xf32> to vector<1x128xf32>
    %66 = arith.mulf %64, %65 : vector<1x128xf32>
    %67 = vector.extract_strided_slice %4 {offsets = [4, 0], sizes = [1, 128], strides = [1, 1]} : vector<9x128xf32> to vector<1x128xf32>
    %68 = vector.extract_strided_slice %4 {offsets = [5, 0], sizes = [1, 128], strides = [1, 1]} : vector<9x128xf32> to vector<1x128xf32>
    %69 = arith.mulf %67, %68 : vector<1x128xf32>
    %70 = arith.addf %66, %69 : vector<1x128xf32>
    %71 = vector.extract_strided_slice %4 {offsets = [5, 0], sizes = [1, 128], strides = [1, 1]} : vector<9x128xf32> to vector<1x128xf32>
    %72 = vector.extract_strided_slice %4 {offsets = [8, 0], sizes = [1, 128], strides = [1, 1]} : vector<9x128xf32> to vector<1x128xf32>
    %73 = arith.mulf %71, %72 : vector<1x128xf32>
    %74 = arith.addf %70, %73 : vector<1x128xf32>
    %75 = vector.extract_strided_slice %4 {offsets = [6, 0], sizes = [1, 128], strides = [1, 1]} : vector<9x128xf32> to vector<1x128xf32>
    %76 = vector.extract_strided_slice %4 {offsets = [0, 0], sizes = [1, 128], strides = [1, 1]} : vector<9x128xf32> to vector<1x128xf32>
    %77 = arith.mulf %75, %76 : vector<1x128xf32>
    %78 = vector.extract_strided_slice %4 {offsets = [7, 0], sizes = [1, 128], strides = [1, 1]} : vector<9x128xf32> to vector<1x128xf32>
    %79 = vector.extract_strided_slice %4 {offsets = [3, 0], sizes = [1, 128], strides = [1, 1]} : vector<9x128xf32> to vector<1x128xf32>
    %80 = arith.mulf %78, %79 : vector<1x128xf32>
    %81 = arith.addf %77, %80 : vector<1x128xf32>
    %82 = vector.extract_strided_slice %4 {offsets = [8, 0], sizes = [1, 128], strides = [1, 1]} : vector<9x128xf32> to vector<1x128xf32>
    %83 = vector.extract_strided_slice %4 {offsets = [6, 0], sizes = [1, 128], strides = [1, 1]} : vector<9x128xf32> to vector<1x128xf32>
    %84 = arith.mulf %82, %83 : vector<1x128xf32>
    %85 = arith.addf %81, %84 : vector<1x128xf32>
    %86 = vector.extract_strided_slice %4 {offsets = [6, 0], sizes = [1, 128], strides = [1, 1]} : vector<9x128xf32> to vector<1x128xf32>
    %87 = vector.extract_strided_slice %4 {offsets = [1, 0], sizes = [1, 128], strides = [1, 1]} : vector<9x128xf32> to vector<1x128xf32>
    %88 = arith.mulf %86, %87 : vector<1x128xf32>
    %89 = vector.extract_strided_slice %4 {offsets = [7, 0], sizes = [1, 128], strides = [1, 1]} : vector<9x128xf32> to vector<1x128xf32>
    %90 = vector.extract_strided_slice %4 {offsets = [4, 0], sizes = [1, 128], strides = [1, 1]} : vector<9x128xf32> to vector<1x128xf32>
    %91 = arith.mulf %89, %90 : vector<1x128xf32>
    %92 = arith.addf %88, %91 : vector<1x128xf32>
    %93 = vector.extract_strided_slice %4 {offsets = [8, 0], sizes = [1, 128], strides = [1, 1]} : vector<9x128xf32> to vector<1x128xf32>
    %94 = vector.extract_strided_slice %4 {offsets = [7, 0], sizes = [1, 128], strides = [1, 1]} : vector<9x128xf32> to vector<1x128xf32>
    %95 = arith.mulf %93, %94 : vector<1x128xf32>
    %96 = arith.addf %92, %95 : vector<1x128xf32>
    %97 = vector.extract_strided_slice %4 {offsets = [6, 0], sizes = [1, 128], strides = [1, 1]} : vector<9x128xf32> to vector<1x128xf32>
    %98 = vector.extract_strided_slice %4 {offsets = [2, 0], sizes = [1, 128], strides = [1, 1]} : vector<9x128xf32> to vector<1x128xf32>
    %99 = arith.mulf %97, %98 : vector<1x128xf32>
    %100 = vector.extract_strided_slice %4 {offsets = [7, 0], sizes = [1, 128], strides = [1, 1]} : vector<9x128xf32> to vector<1x128xf32>
    %101 = vector.extract_strided_slice %4 {offsets = [5, 0], sizes = [1, 128], strides = [1, 1]} : vector<9x128xf32> to vector<1x128xf32>
    %102 = arith.mulf %100, %101 : vector<1x128xf32>
    %103 = arith.addf %99, %102 : vector<1x128xf32>
    %104 = vector.extract_strided_slice %4 {offsets = [8, 0], sizes = [1, 128], strides = [1, 1]} : vector<9x128xf32> to vector<1x128xf32>
    %105 = vector.extract_strided_slice %4 {offsets = [8, 0], sizes = [1, 128], strides = [1, 1]} : vector<9x128xf32> to vector<1x128xf32>
    %106 = arith.mulf %104, %105 : vector<1x128xf32>
    %107 = arith.addf %103, %106 : vector<1x128xf32>
    %108 = tpu.concatenate %19, %30, %41, %52, %63, %74, %85, %96, %107 in 0 : vector<1x128xf32>, vector<1x128xf32>, vector<1x128xf32>, vector<1x128xf32>, vector<1x128xf32>, vector<1x128xf32>, vector<1x128xf32>, vector<1x128xf32>, vector<1x128xf32> -> vector<9x128xf32>
    %109 = vector.extract_strided_slice %108 {offsets = [0, 0], sizes = [1, 128], strides = [1, 1]} : vector<9x128xf32> to vector<1x128xf32>
    %110 = vector.extract_strided_slice %108 {offsets = [0, 0], sizes = [1, 128], strides = [1, 1]} : vector<9x128xf32> to vector<1x128xf32>
    %111 = arith.mulf %109, %110 : vector<1x128xf32>
    %112 = vector.extract_strided_slice %108 {offsets = [1, 0], sizes = [1, 128], strides = [1, 1]} : vector<9x128xf32> to vector<1x128xf32>
    %113 = vector.extract_strided_slice %108 {offsets = [3, 0], sizes = [1, 128], strides = [1, 1]} : vector<9x128xf32> to vector<1x128xf32>
    %114 = arith.mulf %112, %113 : vector<1x128xf32>
    %115 = arith.addf %111, %114 : vector<1x128xf32>
    %116 = vector.extract_strided_slice %108 {offsets = [2, 0], sizes = [1, 128], strides = [1, 1]} : vector<9x128xf32> to vector<1x128xf32>
    %117 = vector.extract_strided_slice %108 {offsets = [6, 0], sizes = [1, 128], strides = [1, 1]} : vector<9x128xf32> to vector<1x128xf32>
    %118 = arith.mulf %116, %117 : vector<1x128xf32>
    %119 = arith.addf %115, %118 : vector<1x128xf32>
    %120 = vector.extract_strided_slice %108 {offsets = [0, 0], sizes = [1, 128], strides = [1, 1]} : vector<9x128xf32> to vector<1x128xf32>
    %121 = vector.extract_strided_slice %108 {offsets = [1, 0], sizes = [1, 128], strides = [1, 1]} : vector<9x128xf32> to vector<1x128xf32>
    %122 = arith.mulf %120, %121 : vector<1x128xf32>
    %123 = vector.extract_strided_slice %108 {offsets = [1, 0], sizes = [1, 128], strides = [1, 1]} : vector<9x128xf32> to vector<1x128xf32>
    %124 = vector.extract_strided_slice %108 {offsets = [4, 0], sizes = [1, 128], strides = [1, 1]} : vector<9x128xf32> to vector<1x128xf32>
    %125 = arith.mulf %123, %124 : vector<1x128xf32>
    %126 = arith.addf %122, %125 : vector<1x128xf32>
    %127 = vector.extract_strided_slice %108 {offsets = [2, 0], sizes = [1, 128], strides = [1, 1]} : vector<9x128xf32> to vector<1x128xf32>
    %128 = vector.extract_strided_slice %108 {offsets = [7, 0], sizes = [1, 128], strides = [1, 1]} : vector<9x128xf32> to vector<1x128xf32>
    %129 = arith.mulf %127, %128 : vector<1x128xf32>
    %130 = arith.addf %126, %129 : vector<1x128xf32>
    %131 = vector.extract_strided_slice %108 {offsets = [0, 0], sizes = [1, 128], strides = [1, 1]} : vector<9x128xf32> to vector<1x128xf32>
    %132 = vector.extract_strided_slice %108 {offsets = [2, 0], sizes = [1, 128], strides = [1, 1]} : vector<9x128xf32> to vector<1x128xf32>
    %133 = arith.mulf %131, %132 : vector<1x128xf32>
    %134 = vector.extract_strided_slice %108 {offsets = [1, 0], sizes = [1, 128], strides = [1, 1]} : vector<9x128xf32> to vector<1x128xf32>
    %135 = vector.extract_strided_slice %108 {offsets = [5, 0], sizes = [1, 128], strides = [1, 1]} : vector<9x128xf32> to vector<1x128xf32>
    %136 = arith.mulf %134, %135 : vector<1x128xf32>
    %137 = arith.addf %133, %136 : vector<1x128xf32>
    %138 = vector.extract_strided_slice %108 {offsets = [2, 0], sizes = [1, 128], strides = [1, 1]} : vector<9x128xf32> to vector<1x128xf32>
    %139 = vector.extract_strided_slice %108 {offsets = [8, 0], sizes = [1, 128], strides = [1, 1]} : vector<9x128xf32> to vector<1x128xf32>
    %140 = arith.mulf %138, %139 : vector<1x128xf32>
    %141 = arith.addf %137, %140 : vector<1x128xf32>
    %142 = vector.extract_strided_slice %108 {offsets = [3, 0], sizes = [1, 128], strides = [1, 1]} : vector<9x128xf32> to vector<1x128xf32>
    %143 = vector.extract_strided_slice %108 {offsets = [0, 0], sizes = [1, 128], strides = [1, 1]} : vector<9x128xf32> to vector<1x128xf32>
    %144 = arith.mulf %142, %143 : vector<1x128xf32>
    %145 = vector.extract_strided_slice %108 {offsets = [4, 0], sizes = [1, 128], strides = [1, 1]} : vector<9x128xf32> to vector<1x128xf32>
    %146 = vector.extract_strided_slice %108 {offsets = [3, 0], sizes = [1, 128], strides = [1, 1]} : vector<9x128xf32> to vector<1x128xf32>
    %147 = arith.mulf %145, %146 : vector<1x128xf32>
    %148 = arith.addf %144, %147 : vector<1x128xf32>
    %149 = vector.extract_strided_slice %108 {offsets = [5, 0], sizes = [1, 128], strides = [1, 1]} : vector<9x128xf32> to vector<1x128xf32>
    %150 = vector.extract_strided_slice %108 {offsets = [6, 0], sizes = [1, 128], strides = [1, 1]} : vector<9x128xf32> to vector<1x128xf32>
    %151 = arith.mulf %149, %150 : vector<1x128xf32>
    %152 = arith.addf %148, %151 : vector<1x128xf32>
    %153 = vector.extract_strided_slice %108 {offsets = [3, 0], sizes = [1, 128], strides = [1, 1]} : vector<9x128xf32> to vector<1x128xf32>
    %154 = vector.extract_strided_slice %108 {offsets = [1, 0], sizes = [1, 128], strides = [1, 1]} : vector<9x128xf32> to vector<1x128xf32>
    %155 = arith.mulf %153, %154 : vector<1x128xf32>
    %156 = vector.extract_strided_slice %108 {offsets = [4, 0], sizes = [1, 128], strides = [1, 1]} : vector<9x128xf32> to vector<1x128xf32>
    %157 = vector.extract_strided_slice %108 {offsets = [4, 0], sizes = [1, 128], strides = [1, 1]} : vector<9x128xf32> to vector<1x128xf32>
    %158 = arith.mulf %156, %157 : vector<1x128xf32>
    %159 = arith.addf %155, %158 : vector<1x128xf32>
    %160 = vector.extract_strided_slice %108 {offsets = [5, 0], sizes = [1, 128], strides = [1, 1]} : vector<9x128xf32> to vector<1x128xf32>
    %161 = vector.extract_strided_slice %108 {offsets = [7, 0], sizes = [1, 128], strides = [1, 1]} : vector<9x128xf32> to vector<1x128xf32>
    %162 = arith.mulf %160, %161 : vector<1x128xf32>
    %163 = arith.addf %159, %162 : vector<1x128xf32>
    %164 = vector.extract_strided_slice %108 {offsets = [3, 0], sizes = [1, 128], strides = [1, 1]} : vector<9x128xf32> to vector<1x128xf32>
    %165 = vector.extract_strided_slice %108 {offsets = [2, 0], sizes = [1, 128], strides = [1, 1]} : vector<9x128xf32> to vector<1x128xf32>
    %166 = arith.mulf %164, %165 : vector<1x128xf32>
    %167 = vector.extract_strided_slice %108 {offsets = [4, 0], sizes = [1, 128], strides = [1, 1]} : vector<9x128xf32> to vector<1x128xf32>
    %168 = vector.extract_strided_slice %108 {offsets = [5, 0], sizes = [1, 128], strides = [1, 1]} : vector<9x128xf32> to vector<1x128xf32>
    %169 = arith.mulf %167, %168 : vector<1x128xf32>
    %170 = arith.addf %166, %169 : vector<1x128xf32>
    %171 = vector.extract_strided_slice %108 {offsets = [5, 0], sizes = [1, 128], strides = [1, 1]} : vector<9x128xf32> to vector<1x128xf32>
    %172 = vector.extract_strided_slice %108 {offsets = [8, 0], sizes = [1, 128], strides = [1, 1]} : vector<9x128xf32> to vector<1x128xf32>
    %173 = arith.mulf %171, %172 : vector<1x128xf32>
    %174 = arith.addf %170, %173 : vector<1x128xf32>
    %175 = vector.extract_strided_slice %108 {offsets = [6, 0], sizes = [1, 128], strides = [1, 1]} : vector<9x128xf32> to vector<1x128xf32>
    %176 = vector.extract_strided_slice %108 {offsets = [0, 0], sizes = [1, 128], strides = [1, 1]} : vector<9x128xf32> to vector<1x128xf32>
    %177 = arith.mulf %175, %176 : vector<1x128xf32>
    %178 = vector.extract_strided_slice %108 {offsets = [7, 0], sizes = [1, 128], strides = [1, 1]} : vector<9x128xf32> to vector<1x128xf32>
    %179 = vector.extract_strided_slice %108 {offsets = [3, 0], sizes = [1, 128], strides = [1, 1]} : vector<9x128xf32> to vector<1x128xf32>
    %180 = arith.mulf %178, %179 : vector<1x128xf32>
    %181 = arith.addf %177, %180 : vector<1x128xf32>
    %182 = vector.extract_strided_slice %108 {offsets = [8, 0], sizes = [1, 128], strides = [1, 1]} : vector<9x128xf32> to vector<1x128xf32>
    %183 = vector.extract_strided_slice %108 {offsets = [6, 0], sizes = [1, 128], strides = [1, 1]} : vector<9x128xf32> to vector<1x128xf32>
    %184 = arith.mulf %182, %183 : vector<1x128xf32>
    %185 = arith.addf %181, %184 : vector<1x128xf32>
    %186 = vector.extract_strided_slice %108 {offsets = [6, 0], sizes = [1, 128], strides = [1, 1]} : vector<9x128xf32> to vector<1x128xf32>
    %187 = vector.extract_strided_slice %108 {offsets = [1, 0], sizes = [1, 128], strides = [1, 1]} : vector<9x128xf32> to vector<1x128xf32>
    %188 = arith.mulf %186, %187 : vector<1x128xf32>
    %189 = vector.extract_strided_slice %108 {offsets = [7, 0], sizes = [1, 128], strides = [1, 1]} : vector<9x128xf32> to vector<1x128xf32>
    %190 = vector.extract_strided_slice %108 {offsets = [4, 0], sizes = [1, 128], strides = [1, 1]} : vector<9x128xf32> to vector<1x128xf32>
    %191 = arith.mulf %189, %190 : vector<1x128xf32>
    %192 = arith.addf %188, %191 : vector<1x128xf32>
    %193 = vector.extract_strided_slice %108 {offsets = [8, 0], sizes = [1, 128], strides = [1, 1]} : vector<9x128xf32> to vector<1x128xf32>
    %194 = vector.extract_strided_slice %108 {offsets = [7, 0], sizes = [1, 128], strides = [1, 1]} : vector<9x128xf32> to vector<1x128xf32>
    %195 = arith.mulf %193, %194 : vector<1x128xf32>
    %196 = arith.addf %192, %195 : vector<1x128xf32>
    %197 = vector.extract_strided_slice %108 {offsets = [6, 0], sizes = [1, 128], strides = [1, 1]} : vector<9x128xf32> to vector<1x128xf32>
    %198 = vector.extract_strided_slice %108 {offsets = [2, 0], sizes = [1, 128], strides = [1, 1]} : vector<9x128xf32> to vector<1x128xf32>
    %199 = arith.mulf %197, %198 : vector<1x128xf32>
    %200 = vector.extract_strided_slice %108 {offsets = [7, 0], sizes = [1, 128], strides = [1, 1]} : vector<9x128xf32> to vector<1x128xf32>
    %201 = vector.extract_strided_slice %108 {offsets = [5, 0], sizes = [1, 128], strides = [1, 1]} : vector<9x128xf32> to vector<1x128xf32>
    %202 = arith.mulf %200, %201 : vector<1x128xf32>
    %203 = arith.addf %199, %202 : vector<1x128xf32>
    %204 = vector.extract_strided_slice %108 {offsets = [8, 0], sizes = [1, 128], strides = [1, 1]} : vector<9x128xf32> to vector<1x128xf32>
    %205 = vector.extract_strided_slice %108 {offsets = [8, 0], sizes = [1, 128], strides = [1, 1]} : vector<9x128xf32> to vector<1x128xf32>
    %206 = arith.mulf %204, %205 : vector<1x128xf32>
    %207 = arith.addf %203, %206 : vector<1x128xf32>
    %208 = tpu.concatenate %119, %130, %141, %152, %163, %174, %185, %196, %207 in 0 : vector<1x128xf32>, vector<1x128xf32>, vector<1x128xf32>, vector<1x128xf32>, vector<1x128xf32>, vector<1x128xf32>, vector<1x128xf32>, vector<1x128xf32>, vector<1x128xf32> -> vector<9x128xf32>
    %209 = vector.broadcast %8 : vector<1x128xf32> to vector<9x128xf32>
    %210 = arith.addf %208, %209 : vector<9x128xf32>
    %211 = arith.addf %210, %2 : vector<9x128xf32>
    %c0_3 = arith.constant 0 : index
    %c0_4 = arith.constant 0 : index
    %212 = vector.load %arg2[%c0_3, %c0_4] : memref<9x128xf32, #tpu.memory_space<vmem>>, vector<9x128xf32>
    tpu.vector_store %arg2[%c0_3, %c0_4], %211 {strides = array<i32>} : memref<9x128xf32, #tpu.memory_space<vmem>>, vector<9x128xf32>,
    return
  }
  func.func @transform_0(%arg0: i32) -> (i32, i32) {
    %c0_i32 = arith.constant 0 : i32
    %c0_i32_0 = arith.constant 0 : i32
    return %c0_i32, %arg0 : i32, i32
  }
  func.func @transform_1(%arg0: i32) -> (i32, i32) {
    %c0_i32 = arith.constant 0 : i32
    %c0_i32_0 = arith.constant 0 : i32
    return %c0_i32, %arg0 : i32, i32
  }
}

</mosaic_0001>

<llo_original>
// kernel: tpu_custom_call.1
$region0: #{tpu_custom_call.1}
  #allocation0 [shape = 'u32[]', space=smem, size = 0x4, offset = 0x4, fixed_abs, tag = 'smem constant byte address 0x4 - core index']
  #allocation1 [shape = 'u32[144,128]{1,0:T(1,128)}', space=vmem, size = 0x12000, scoped, tag = 'internal scratch']
  %s0 = inlined_call_operand.hbm [shape: f32[18,256], index: 0, kind: input, shape index: {}]
  %s1 = inlined_call_operand.hbm [shape: f32[9,256], index: 1, kind: output, shape index: {}]
  %s2 = sld [smem:[#allocation0]]
  $region41: #{tpu_custom_call.1} parent=0
    _
  %s4 = ssub.s32 1, %s2
  %s5 = scalar_select 0, %s4, %s2
  $region1: #{tpu_custom_call.1} parent=0
    #allocation2 [shape = 'u8[24576]{0}', space=vmem, size = 0x6000, scoped, tag = 'input window, operand 0']
    #allocation3 [shape = 's32[2]{0}', space=sflag, size = 0x8, scoped, tag = 'scoped memory for tpu_custom_call.1']
    #allocation4 [shape = 's32[2]{0}', space=sflag, size = 0x8, scoped, tag = 'scoped memory for tpu_custom_call.1']
    #allocation5 [shape = 'u8[16384]{0}', space=vmem, size = 0x4000, scoped, tag = 'output window, operand 0']
    %6 = vsyncpa [#allocation3], 0
    %s7 = scalar_lea.sflag [#allocation3], 1
    %8 = vsyncpa %s7, 0
    %9 = vsyncpa [#allocation4], 0
    %s10 = scalar_lea.sflag [#allocation4], 1
    %11 = vsyncpa %s10, 0
    loop: start=0, step=1, limit=4
    $region2: #{tpu_custom_call.1} parent=1 // loop_pre_header
      _
    $region3: #{tpu_custom_call.1} parent=1 // loop_header
      %s13 = sphi 0, %s17
      %p14 = scmp.ge.s32.totalorder %s13, 4
      %s23 = sphi 0, %s25
      %s26 = sphi 0, %s23
      %s27 = sphi 0, %s26
      %s43 = sphi 0, %s27
      %s49 = sphi 0, %s51
      %s52 = sphi 0, %s49
      %s53 = sphi 0, %s52
      %s69 = sphi 0, %s53
    $region4: #{tpu_custom_call.1} parent=1 // loop_header_branch
      %16 = sbr.rel (%p14) target = $region8
    $region5: #{tpu_custom_call.1} parent=1 // loop_body
      %s18 = ssub.s32 %s13, 1
      %s19 = ssub.s32 %s13, 2
      %s20 = sadd.s32 %s13, 1
      %s21 = ssub.s32 %s13, %s20
      %p22 = scmp.eq.s32.totalorder %s21, 0
      %s24 = sadd.s32 %s23, 1
      %s25 = scalar_select %p22, %s23, %s24
      %p28 = pneg %p22
      %p29 = scmp.eq.s32.totalorder %s13, 1
      %p30 = por %p28, %p29
      %p31 = scmp.ne.s32.totalorder %s23, %s26
      %p32 = scmp.eq.s32.totalorder %s13, 0
      %p33 = por %p31, %p32
      %p34 = scmp.ne.s32.totalorder %s23, %s26
      %p35 = scmp.eq.s32.totalorder %s18, 1
      %p36 = por %p34, %p35
      %p37 = scmp.ne.s32.totalorder %s26, %s27
      %p38 = scmp.eq.s32.totalorder %s18, 0
      %p39 = por %p37, %p38
      %p40 = scmp.ne.s32.totalorder %s26, %s27
      %p41 = scmp.eq.s32.totalorder %s19, 1
      %p42 = por %p40, %p41
      %p44 = scmp.ne.s32.totalorder %s27, %s43
      %p45 = scmp.eq.s32.totalorder %s19, 0
      %p46 = por %p44, %p45
      %s47 = ssub.s32 %s13, %s20
      %p48 = scmp.eq.s32.totalorder %s47, 0
      %s50 = sadd.s32 %s49, 1
      %s51 = scalar_select %p48, %s49, %s50
      %p54 = pneg %p48
      %p55 = scmp.eq.s32.totalorder %s13, 1
      %p56 = por %p54, %p55
      %p57 = scmp.ne.s32.totalorder %s49, %s52
      %p58 = scmp.eq.s32.totalorder %s13, 0
      %p59 = por %p57, %p58
      %p60 = scmp.ne.s32.totalorder %s49, %s52
      %p61 = scmp.eq.s32.totalorder %s18, 1
      %p62 = por %p60, %p61
      %p63 = scmp.ne.s32.totalorder %s52, %s53
      %p64 = scmp.eq.s32.totalorder %s18, 0
      %p65 = por %p63, %p64
      %p66 = scmp.ne.s32.totalorder %s52, %s53
      %p67 = scmp.eq.s32.totalorder %s19, 1
      %p68 = por %p66, %p67
      %p70 = scmp.ne.s32.totalorder %s53, %s69
      %p71 = scmp.eq.s32.totalorder %s19, 0
      %p72 = por %p70, %p71
      %p73 = scmp.le.s32.totalorder 1, %s13
      %p74 = scmp.lt.s32.totalorder %s13, 3
      %p75 = pnand %p73, %p74
      %p76 = pneg %p75
      // Predicated region
      $region9: #{tpu_custom_call.1} parent=5 // pred_check
        _
      $region10: #{tpu_custom_call.1} parent=5 // pred_check_branch
        %78 = sbr.rel (%p75) target = $region12
      $region11: #{tpu_custom_call.1} parent=5 // pred_region
        %s79 = ssub.s32 %s13, 1
      $region12: #{tpu_custom_call.1} parent=5 // pred_fallthru
        _
      %p80 = scmp.lt.s32.totalorder %s13, 2
      // Predicated region
      $region13: #{tpu_custom_call.1} parent=5 // pred_check
        %p81 = pneg %p80
      $region14: #{tpu_custom_call.1} parent=5 // pred_check_branch
        %83 = sbr.rel (%p81) target = $region16
      $region15: #{tpu_custom_call.1} parent=5 // pred_region
        // Predicated region
        $region17: #{tpu_custom_call.1} parent=15 // pred_check
          %p84 = pneg %p33
        $region18: #{tpu_custom_call.1} parent=15 // pred_check_branch
          %86 = sbr.rel (%p84) target = $region20
        $region19: #{tpu_custom_call.1} parent=15 // pred_region
          %s87 = sand.u32 %s23, 1
          %s88 = scalar_lea.sflag [#allocation3], %s87
          %s89 = sand.u32 %s23, 1
          %s90 = smul.addr %s89, 24
          %s91 = scalar_lea.vmem [#allocation2], %s90
          %s93 = ssub.s32 384, 384
          %94 = vsyncadd %s88, %s93
          %s95 = smul.addr %s13, 128
          %s96 = scalar_lea.hbm %s0, %s95
          %s97 = sshll.u32 %s91, 4
          %s98 = int_to_ptr.vmem [resolvable:$true] %s97
          %103 = dma.hbm_to_vmem [thread:$0]  %s96, 384, %s98, %s88, 256, 128, 8
        $region20: #{tpu_custom_call.1} parent=15 // pred_fallthru
          _
      $region16: #{tpu_custom_call.1} parent=5 // pred_fallthru
        _
      %p104 = scmp.le.s32.totalorder 1, %s13
      %p105 = scmp.lt.s32.totalorder %s13, 3
      %p106 = pnand %p104, %p105
      %p107 = pneg %p106
      // Predicated region
      $region21: #{tpu_custom_call.1} parent=5 // pred_check
        _
      $region22: #{tpu_custom_call.1} parent=5 // pred_check_branch
        %109 = sbr.rel (%p106) target = $region24
      $region23: #{tpu_custom_call.1} parent=5 // pred_region
        %s110 = ssub.s32 %s13, 1
        %s111 = sand.u32 %s26, 1
        %s112 = scalar_lea.sflag [#allocation3], %s111
        %s113 = sand.u32 %s26, 1
        %s114 = smul.addr %s113, 24
        %s115 = scalar_lea.vmem [#allocation2], %s114
        // Predicated region
        $region25: #{tpu_custom_call.1} parent=23 // pred_check
          %p116 = pneg %p39
        $region26: #{tpu_custom_call.1} parent=23 // pred_check_branch
          %118 = sbr.rel (%p116) target = $region28
        $region27: #{tpu_custom_call.1} parent=23 // pred_region
          %119 = dma.done %s112, 384
        $region28: #{tpu_custom_call.1} parent=23 // pred_fallthru
          _
        %s120 = sand.u32 %s26, 1
        %s121 = scalar_lea.sflag [#allocation3], %s120
        %s122 = sand.u32 %s26, 1
        %s123 = smul.addr %s122, 24
        %s124 = scalar_lea.vmem [#allocation2], %s123
        %p125 = pneg %p39
        %p126 = pneg %p36
        %p127 = pneg %p65
        %p128 = pneg %p62
        %s129 = sand.u32 %s52, 1
        %s130 = scalar_lea.sflag [#allocation4], %s129
        %s131 = sand.u32 %s52, 1
        %s132 = smul.addr %s131, 16
        %s133 = scalar_lea.vmem [#allocation5], %s132
        %v134 = vld [vmem:[%s115] sm:$0xff]
        %v135 = vld [vmem:[%s115 + $0x8] sm:$0xff]
        %v136 = vld [vmem:[%s115 + $0x10] sm:$0x3]
        %v137 = vmax.f32 %v134, 0.0
        %v138 = vmax.f32 %v135, 0.0
        %vm139 = vcmask 1040384
        %v140 = vsel %vm139, %v138, 0.0
        %v141 = vadd.f32 %v137, %v140
        %v142 = vrot.slane %v141, 4
        %v143 = vadd.f32 %v141, %v142
        %v144 = vrot.slane %v143, 2
        %v145 = vadd.f32 %v143, %v144
        %v146 = vrot.slane %v145, 1
        %v147 = vadd.f32 %v145, %v146
        %v148 = vmul.f32 %v147, 0.11111111
        %v149 = vmul.f32 %v137, %v137
        %v151 = vrot.slane %v137, 2
        %v153 = vmul.f32 %v137, %v151
        %v155 = vrot.slane %v153, 1
        %v157 = vadd.f32 %v149, %v155
        %v158 = vrot.slane %v137, 4
        %v160 = vmul.f32 %v137, %v158
        %v162 = vrot.slane %v160, 2
        %v164 = vadd.f32 %v157, %v162
        %v165 = vrot.slane %v137, 1
        %v167 = vmul.f32 %v137, %v165
        %v168 = vrot.slane %v137, 3
        %v170 = vmul.f32 %v137, %v168
        %v172 = vrot.slane %v170, 1
        %v174 = vadd.f32 %v167, %v172
        %v175 = vrot.slane %v137, 5
        %v177 = vmul.f32 %v137, %v175
        %v179 = vrot.slane %v177, 2
        %v181 = vadd.f32 %v174, %v179
        %v182 = vrot.slane %v160, 1
        %v184 = vadd.f32 %v153, %v182
        %v186 = vrot.slane %v138, 6
        %v188 = vmul.f32 %v137, %v186
        %v190 = vrot.slane %v188, 2
        %v192 = vadd.f32 %v184, %v190
        %v193 = vrot.slane %v137, 7
        %v195 = vmul.f32 %v137, %v193
        %v197 = vrot.slane %v195, 1
        %v199 = vadd.f32 %v177, %v197
        %v201 = vrot.slane %v167, 2
        %v203 = vadd.f32 %v199, %v201
        %v205 = vrot.slane %v149, 3
        %v207 = vadd.f32 %v153, %v205
        %v208 = vrot.slane %v153, 4
        %v210 = vadd.f32 %v207, %v208
        %v211 = vrot.slane %v167, 1
        %v213 = vadd.f32 %v195, %v211
        %v214 = vrot.slane %v138, 3
        %v216 = vmul.f32 %v137, %v214
        %v218 = vrot.slane %v216, 2
        %v220 = vadd.f32 %v213, %v218
        %v221 = vrot.slane %v137, 6
        %v223 = vmul.f32 %v138, %v221
        %v225 = vrot.slane %v223, 2
        %v227 = vadd.f32 %v184, %v225
        %v228 = vrot.slane %v177, 1
        %v230 = vadd.f32 %v170, %v228
        %v231 = vmul.f32 %v138, %v193
        %v233 = vrot.slane %v231, 2
        %v235 = vadd.f32 %v230, %v233
        %v236 = vrot.slane %v153, 3
        %v238 = vadd.f32 %v160, %v236
        %v239 = vmul.f32 %v138, %v138
        %v241 = vrot.slane %v239, 6
        %v243 = vadd.f32 %v238, %v241
        %v245 = vrot.slane %v181, 7
        %v248 = vrot.slane %v192, 6
        %v251 = vrot.slane %v210, 5
        %v254 = vrot.slane %v220, 6
        %v257 = vrot.slane %v235, 7
        %v260 = vrot.slane %v243, 2
        %v262 = vsel %vm139, %v164, %v245
        %vm263 = vcmask 1041408
        %v264 = vsel %vm263, %v262, %v248
        %vm265 = vcmask 1042432
        %v266 = vsel %vm265, %v264, %v203
        %vm267 = vcmask 1043456
        %v268 = vsel %vm267, %v266, %v251
        %vm269 = vcmask 1044480
        %v270 = vsel %vm269, %v268, %v254
        %vm271 = vcmask 1045504
        %v272 = vsel %vm271, %v270, %v227
        %vm273 = vcmask 1046528
        %v274 = vsel %vm273, %v272, %v257
        %v275 = vmul.f32 %v274, %v274
        %v277 = vrot.slane %v274, 2
        %v279 = vmul.f32 %v274, %v277
        %v281 = vrot.slane %v279, 1
        %v283 = vadd.f32 %v275, %v281
        %v284 = vrot.slane %v274, 4
        %v286 = vmul.f32 %v274, %v284
        %v288 = vrot.slane %v286, 2
        %v290 = vadd.f32 %v283, %v288
        %v291 = vrot.slane %v274, 1
        %v293 = vmul.f32 %v274, %v291
        %v294 = vrot.slane %v274, 3
        %v296 = vmul.f32 %v274, %v294
        %v298 = vrot.slane %v296, 1
        %v300 = vadd.f32 %v293, %v298
        %v301 = vrot.slane %v274, 5
        %v303 = vmul.f32 %v274, %v301
        %v305 = vrot.slane %v303, 2
        %v307 = vadd.f32 %v300, %v305
        %v308 = vrot.slane %v286, 1
        %v310 = vadd.f32 %v279, %v308
        %v311 = vrot.slane %v260, 6
        %v313 = vmul.f32 %v274, %v311
        %v315 = vrot.slane %v313, 2
        %v317 = vadd.f32 %v310, %v315
        %v318 = vrot.slane %v274, 7
        %v320 = vmul.f32 %v274, %v318
        %v322 = vrot.slane %v320, 1
        %v324 = vadd.f32 %v303, %v322
        %v326 = vrot.slane %v293, 2
        %v328 = vadd.f32 %v324, %v326
        %v330 = vrot.slane %v275, 3
        %v332 = vadd.f32 %v279, %v330
        %v333 = vrot.slane %v279, 4
        %v335 = vadd.f32 %v332, %v333
        %v336 = vrot.slane %v293, 1
        %v338 = vadd.f32 %v320, %v336
        %v339 = vrot.slane %v260, 3
        %v341 = vmul.f32 %v274, %v339
        %v343 = vrot.slane %v341, 2
        %v345 = vadd.f32 %v338, %v343
        %v346 = vrot.slane %v274, 6
        %v348 = vmul.f32 %v260, %v346
        %v350 = vrot.slane %v348, 2
        %v352 = vadd.f32 %v310, %v350
        %v353 = vrot.slane %v303, 1
        %v355 = vadd.f32 %v296, %v353
        %v356 = vmul.f32 %v260, %v318
        %v358 = vrot.slane %v356, 2
        %v360 = vadd.f32 %v355, %v358
        %v361 = vrot.slane %v279, 3
        %v363 = vadd.f32 %v286, %v361
        %v364 = vmul.f32 %v260, %v260
        %v366 = vrot.slane %v364, 6
        %v368 = vadd.f32 %v363, %v366
        %v370 = vrot.slane %v307, 7
        %v373 = vrot.slane %v317, 6
        %v376 = vrot.slane %v335, 5
        %v379 = vrot.slane %v345, 6
        %v382 = vrot.slane %v360, 7
        %v385 = vrot.slane %v368, 2
        %v387 = vsel %vm139, %v290, %v370
        %v388 = vsel %vm263, %v387, %v373
        %v389 = vsel %vm265, %v388, %v328
        %v390 = vsel %vm267, %v389, %v376
        %v391 = vsel %vm269, %v390, %v379
        %v392 = vsel %vm271, %v391, %v352
        %v393 = vsel %vm273, %v392, %v382
        %v394 = vadd.f32 %v393, %v148
        %v395 = vadd.f32 %v385, %v148
        %v398 = vrot.slane %v135, 1
        %v399 = vrot.slane %v136, 1
        %v400 = vsel %vm273, %v398, %v399
        %v403 = vadd.f32 %v394, %v400
        %v404 = vadd.f32 %v395, %v399
        %405 = vst [vmem:[%s133] sm:$0xff] %v403
        %406 = vst [vmem:[%s133 + $0x8] sm:$0x1] %v404
        %s407 = sand.u32 %s52, 1
        %s408 = scalar_lea.sflag [#allocation4], %s407
        %s409 = sand.u32 %s52, 1
        %s410 = smul.addr %s409, 16
        %s411 = scalar_lea.vmem [#allocation5], %s410
        // Predicated region
        $region29: #{tpu_custom_call.1} parent=23 // pred_check
          %p412 = pneg %p62
        $region30: #{tpu_custom_call.1} parent=23 // pred_check_branch
          %414 = sbr.rel (%p412) target = $region32
        $region31: #{tpu_custom_call.1} parent=23 // pred_region
          %s416 = ssub.s32 256, 256
          %417 = vsyncadd %s408, %s416
          %s418 = smul.addr %s18, 128
          %s419 = scalar_lea.hbm %s1, %s418
          %s420 = sshll.u32 %s411, 4
          %s421 = int_to_ptr.vmem [resolvable:$true] %s420
          %426 = dma.vmem_to_hbm [thread:$0]  %s421, 256, %s419, %s408, 128, 256, 8
        $region32: #{tpu_custom_call.1} parent=23 // pred_fallthru
          _
      $region24: #{tpu_custom_call.1} parent=5 // pred_fallthru
        _
      %p427 = scmp.le.s32.totalorder 2, %s13
      // Predicated region
      $region33: #{tpu_custom_call.1} parent=5 // pred_check
        %p428 = pneg %p427
      $region34: #{tpu_custom_call.1} parent=5 // pred_check_branch
        %430 = sbr.rel (%p428) target = $region36
      $region35: #{tpu_custom_call.1} parent=5 // pred_region
        %s431 = ssub.s32 %s13, 2
        // Predicated region
        $region37: #{tpu_custom_call.1} parent=35 // pred_check
          %p432 = pneg %p68
        $region38: #{tpu_custom_call.1} parent=35 // pred_check_branch
          %434 = sbr.rel (%p432) target = $region40
        $region39: #{tpu_custom_call.1} parent=35 // pred_region
          %s435 = sand.u32 %s53, 1
          %s436 = scalar_lea.sflag [#allocation4], %s435
          %s437 = sand.u32 %s53, 1
          %s438 = smul.addr %s437, 16
          %s439 = scalar_lea.vmem [#allocation5], %s438
          %440 = dma.done %s436, 256
        $region40: #{tpu_custom_call.1} parent=35 // pred_fallthru
          _
      $region36: #{tpu_custom_call.1} parent=5 // pred_fallthru
        _
    $region6: #{tpu_custom_call.1} parent=1 // loop_footer
      %s17 = sadd.s32 1, %s13
    $region7: #{tpu_custom_call.1} parent=1 // loop_footer_branch
      %12 = sbr.rel target = $region3
    $region8: #{tpu_custom_call.1} parent=1 // loop_exit
      _
    %441 = vsyncpa [#allocation3], 1
    %s442 = scalar_lea.sflag [#allocation3], 1
    %443 = vsyncpa %s442, 1
    %444 = vsyncpa [#allocation4], 1
    %s445 = scalar_lea.sflag [#allocation4], 1
    %446 = vsyncpa %s445, 1

</llo_original>
